<compile_context>
chip_gen: v7x
topology: tpu7x:2x2x1
jax: 0.10.0
libtpu: 0.0.40
codegen_flags: <defaults>
</compile_context>

<pallas_src>
import functools

import jax
import jax.numpy as jnp
from jax.experimental import pallas as pl
from jax.experimental.pallas import tpu as pltpu

# MLP dims from the PyTorch module: 1 -> 10 -> 50 -> 30 -> 10 -> 2
DIMS = (1, 10, 50, 30, 10, 2)
N_LAYERS = len(DIMS) - 1

ROW_STRIDE = 64                      # per-layer row block in the packed slab (8-aligned)
SLAB_ROWS = ROW_STRIDE * N_LAYERS    # 320
SLAB_COLS = 64                       # >= max fan-in (50) + 1 bias column
BIAS_COL = SLAB_COLS - 1             # bias lives in the last column of each layer block


def mlp_kernel(p_ref, xt_ref, ot_ref):
    """p_ref:  (320, 64) packed params (weights + bias column),
       xt_ref: (1, Bt)   transposed input tile,
       ot_ref: (2, Bt)   transposed output tile."""
    xt = xt_ref[...]                                   # (1, Bt)

    def wb(layer):
        in_d, out_d = DIMS[layer], DIMS[layer + 1]
        r0 = layer * ROW_STRIDE
        w = p_ref[r0:r0 + out_d, 0:in_d]               # (out_d, in_d)
        b = p_ref[r0:r0 + out_d, BIAS_COL:BIAS_COL + 1]  # (out_d, 1)
        return w, b

    # Layer 1: K == 1 -> pure VPU broadcast multiply-add (no MXU round-trip).
    w1, b1 = wb(0)                                     # (10, 1), (10, 1)
    h = jnp.maximum(w1 * xt + b1, 0.0)                 # (10, Bt)

    # Layers 2..4: Linear + ReLU on the MXU, batch on the lane axis.
    for layer in range(1, N_LAYERS - 1):
        w, b = wb(layer)
        h = jnp.maximum(
            jnp.dot(w, h, preferred_element_type=jnp.float32) + b, 0.0)

    # Layer 5: Linear, no activation.
    w5, b5 = wb(N_LAYERS - 1)                          # (2, 10), (2, 1)
    ot_ref[...] = (jnp.dot(w5, h, preferred_element_type=jnp.float32)
                   + b5).astype(ot_ref.dtype)


def pack_params(params):
    """params: list of (W (out, in), b (out,)) in PyTorch layout.
    Returns a single (320, 64) f32 slab: layer l occupies rows [l*64, l*64+out),
    weights in columns [0, in), bias in column BIAS_COL."""
    slab = jnp.zeros((SLAB_ROWS, SLAB_COLS), jnp.float32)
    for l, (w, b) in enumerate(params):
        out_d, in_d = w.shape
        assert (in_d, out_d) == (DIMS[l], DIMS[l + 1])
        r0 = l * ROW_STRIDE
        slab = slab.at[r0:r0 + out_d, 0:in_d].set(w.astype(jnp.float32))
        slab = slab.at[r0:r0 + out_d, BIAS_COL].set(
            b.astype(jnp.float32).reshape(out_d))
    return slab


@functools.partial(jax.jit, static_argnames=("batch_tile",))
def mlp_forward(x, param_slab, *, batch_tile=512):
    """x: (B, 1) float32 -> (B, 2) float32.  Any B (padded internally)."""
    B, in_dim = x.shape
    assert in_dim == DIMS[0]
    assert batch_tile % 128 == 0, "batch_tile must be lane-aligned (multiple of 128)"
    out_dim = DIMS[-1]

    num_tiles = (B + batch_tile - 1) // batch_tile
    B_pad = num_tiles * batch_tile

    # Transpose so the batch sits on the 128-lane axis; pad to a whole tile.
    xt = x.astype(jnp.float32).T                       # (1, B)
    if B_pad != B:
        xt = jnp.pad(xt, ((0, 0), (0, B_pad - B)))     # padded lanes are harmless

    out_t = pl.pallas_call(
        mlp_kernel,
        out_shape=jax.ShapeDtypeStruct((out_dim, B_pad), jnp.float32),
        grid_spec=pltpu.PrefetchScalarGridSpec(
            num_scalar_prefetch=0,
            grid=(num_tiles,),
            in_specs=[
                pl.BlockSpec((SLAB_ROWS, SLAB_COLS), lambda i: (0, 0)),  # params (invariant)
                pl.BlockSpec((1, batch_tile), lambda i: (0, i)),         # x^T tile
            ],
            out_specs=pl.BlockSpec((out_dim, batch_tile), lambda i: (0, i)),
        ),
        compiler_params=pltpu.CompilerParams(
            dimension_semantics=("parallel",)),
    )(param_slab, xt)

    return out_t[:, :B].T                              # (B, 2)


def init_params(key):
    """Deterministic synthetic init mimicking nn.Linear: W (out, in), b (out,)."""
    params = []
    for fan_in, fan_out in zip(DIMS[:-1], DIMS[1:]):
        key, kw, kb = jax.random.split(key, 3)
        bound = float(fan_in) ** -0.5
        w = jax.random.uniform(kw, (fan_out, fan_in), jnp.float32, -bound, bound)
        b = jax.random.uniform(kb, (fan_out,), jnp.float32, -bound, bound)
        params.append((w, b))
    return params


def mlp_reference(x, params):
    h = x
    for i, (w, b) in enumerate(params):
        h = jnp.dot(h, w.T, precision=jax.lax.Precision.HIGHEST) + b
        if i < len(params) - 1:
            h = jnp.maximum(h, 0.0)
    return h


if __name__ == "__main__":
    key = jax.random.PRNGKey(0)
    kx, kx2, kp = jax.random.split(key, 3)

    params = init_params(kp)
    param_slab = pack_params(params)

    # Small batch (padded internally to a single 128-wide lane tile).
    B_small = 8
    x_small = jax.random.normal(kx, (B_small, DIMS[0]), jnp.float32)
    out_small = jax.block_until_ready(
        mlp_forward(x_small, param_slab, batch_tile=128))
    ref_small = mlp_reference(x_small, params)
    assert out_small.shape == (B_small, DIMS[-1])
    assert jnp.allclose(out_small, ref_small, atol=1e-5, rtol=1e-4), \
        "mismatch (small batch)"

    # Multi-step grid (3 parallel tiles -> exercises megacore sharding on v7x).
    B_multi = 384
    x_multi = jax.random.normal(kx2, (B_multi, DIMS[0]), jnp.float32)
    out_multi = jax.block_until_ready(
        mlp_forward(x_multi, param_slab, batch_tile=128))
    ref_multi = mlp_reference(x_multi, params)
    assert out_multi.shape == (B_multi, DIMS[-1])
    assert jnp.allclose(out_multi, ref_multi, atol=1e-5, rtol=1e-4), \
        "mismatch (multi-tile)"

    print("KERNEL_OK")
</pallas_src>

<mosaic_0001>
module attributes {stable_mosaic.version = 11 : i64} {
  func.func @mlp_kernel(%arg0: i32, %arg1: memref<320x64xf32, #tpu.memory_space<vmem>>, %arg2: memref<1x128xf32, #tpu.memory_space<vmem>>, %arg3: memref<2x128xf32, #tpu.memory_space<vmem>>) attributes {dimension_semantics = [#tpu.dimension_semantics<parallel>], iteration_bounds = array<i64: 1>, scalar_prefetch = 0 : i64, scratch_operands = 0 : i64, tpu.core_type = #tpu.core_type<tc>, window_params = [{pipeline_mode = #tpu.pipeline_mode<synchronous>, transform_indices = @transform_0, window_bounds = array<i64: 320, 64>}, {transform_indices = @transform_1, window_bounds = array<i64: 1, 128>}, {transform_indices = @transform_2, window_bounds = array<i64: 2, 128>}]} {
    %c0 = arith.constant 0 : index
    %c0_0 = arith.constant 0 : index
    %0 = vector.load %arg2[%c0, %c0_0] : memref<1x128xf32, #tpu.memory_space<vmem>>, vector<1x128xf32>
    %c0_1 = arith.constant 0 : index
    %c0_2 = arith.constant 0 : index
    %1 = vector.load %arg1[%c0_1, %c0_2] : memref<320x64xf32, #tpu.memory_space<vmem>>, vector<10x1xf32>
    %c0_3 = arith.constant 0 : index
    %c63 = arith.constant 63 : index
    %2 = vector.load %arg1[%c0_3, %c63] : memref<320x64xf32, #tpu.memory_space<vmem>>, vector<10x1xf32>
    %3 = vector.broadcast %1 : vector<10x1xf32> to vector<10x128xf32>
    %4 = vector.broadcast %0 : vector<1x128xf32> to vector<10x128xf32>
    %5 = arith.mulf %3, %4 : vector<10x128xf32>
    %6 = vector.broadcast %2 : vector<10x1xf32> to vector<10x128xf32>
    %7 = arith.addf %5, %6 : vector<10x128xf32>
    %cst = arith.constant 0.000000e+00 : f32
    %8 = vector.broadcast %cst : f32 to vector<10x128xf32>
    %9 = arith.maximumf %7, %8 : vector<10x128xf32>
    %c64 = arith.constant 64 : index
    %c0_4 = arith.constant 0 : index
    %10 = vector.load %arg1[%c64, %c0_4] : memref<320x64xf32, #tpu.memory_space<vmem>>, vector<50x10xf32>
    %c64_5 = arith.constant 64 : index
    %c63_6 = arith.constant 63 : index
    %11 = vector.load %arg1[%c64_5, %c63_6] : memref<320x64xf32, #tpu.memory_space<vmem>>, vector<50x1xf32>
    %cst_7 = arith.constant dense<0.000000e+00> : vector<50x128xf32>
    %12 = tpu.matmul %10, %9, %cst_7 {dimension_numbers = #tpu.dot_dimension_numbers<[1], [0], [0], [1], [0, 0, 1, 1], [], []>} : vector<50x10xf32>, vector<10x128xf32>, vector<50x128xf32> -> vector<50x128xf32>
    %13 = vector.broadcast %11 : vector<50x1xf32> to vector<50x128xf32>
    %14 = arith.addf %12, %13 : vector<50x128xf32>
    %cst_8 = arith.constant 0.000000e+00 : f32
    %15 = vector.broadcast %cst_8 : f32 to vector<50x128xf32>
    %16 = arith.maximumf %14, %15 : vector<50x128xf32>
    %c128 = arith.constant 128 : index
    %c0_9 = arith.constant 0 : index
    %17 = vector.load %arg1[%c128, %c0_9] : memref<320x64xf32, #tpu.memory_space<vmem>>, vector<30x50xf32>
    %c128_10 = arith.constant 128 : index
    %c63_11 = arith.constant 63 : index
    %18 = vector.load %arg1[%c128_10, %c63_11] : memref<320x64xf32, #tpu.memory_space<vmem>>, vector<30x1xf32>
    %cst_12 = arith.constant dense<0.000000e+00> : vector<30x128xf32>
    %19 = tpu.matmul %17, %16, %cst_12 {dimension_numbers = #tpu.dot_dimension_numbers<[1], [0], [0], [1], [0, 0, 1, 1], [], []>} : vector<30x50xf32>, vector<50x128xf32>, vector<30x128xf32> -> vector<30x128xf32>
    %20 = vector.broadcast %18 : vector<30x1xf32> to vector<30x128xf32>
    %21 = arith.addf %19, %20 : vector<30x128xf32>
    %cst_13 = arith.constant 0.000000e+00 : f32
    %22 = vector.broadcast %cst_13 : f32 to vector<30x128xf32>
    %23 = arith.maximumf %21, %22 : vector<30x128xf32>
    %c192 = arith.constant 192 : index
    %c0_14 = arith.constant 0 : index
    %24 = vector.load %arg1[%c192, %c0_14] : memref<320x64xf32, #tpu.memory_space<vmem>>, vector<10x30xf32>
    %c192_15 = arith.constant 192 : index
    %c63_16 = arith.constant 63 : index
    %25 = vector.load %arg1[%c192_15, %c63_16] : memref<320x64xf32, #tpu.memory_space<vmem>>, vector<10x1xf32>
    %cst_17 = arith.constant dense<0.000000e+00> : vector<10x128xf32>
    %26 = tpu.matmul %24, %23, %cst_17 {dimension_numbers = #tpu.dot_dimension_numbers<[1], [0], [0], [1], [0, 0, 1, 1], [], []>} : vector<10x30xf32>, vector<30x128xf32>, vector<10x128xf32> -> vector<10x128xf32>
    %27 = vector.broadcast %25 : vector<10x1xf32> to vector<10x128xf32>
    %28 = arith.addf %26, %27 : vector<10x128xf32>
    %cst_18 = arith.constant 0.000000e+00 : f32
    %29 = vector.broadcast %cst_18 : f32 to vector<10x128xf32>
    %30 = arith.maximumf %28, %29 : vector<10x128xf32>
    %c256 = arith.constant 256 : index
    %c0_19 = arith.constant 0 : index
    %31 = vector.load %arg1[%c256, %c0_19] : memref<320x64xf32, #tpu.memory_space<vmem>>, vector<2x10xf32>
    %c256_20 = arith.constant 256 : index
    %c63_21 = arith.constant 63 : index
    %32 = vector.load %arg1[%c256_20, %c63_21] : memref<320x64xf32, #tpu.memory_space<vmem>>, vector<2x1xf32>
    %cst_22 = arith.constant dense<0.000000e+00> : vector<2x128xf32>
    %33 = tpu.matmul %31, %30, %cst_22 {dimension_numbers = #tpu.dot_dimension_numbers<[1], [0], [0], [1], [0, 0, 1, 1], [], []>} : vector<2x10xf32>, vector<10x128xf32>, vector<2x128xf32> -> vector<2x128xf32>
    %34 = vector.broadcast %32 : vector<2x1xf32> to vector<2x128xf32>
    %35 = arith.addf %33, %34 : vector<2x128xf32>
    %c0_23 = arith.constant 0 : index
    %c0_24 = arith.constant 0 : index
    %36 = vector.load %arg3[%c0_23, %c0_24] : memref<2x128xf32, #tpu.memory_space<vmem>>, vector<2x128xf32>
    tpu.vector_store %arg3[%c0_23, %c0_24], %35 {strides = array<i32>} : memref<2x128xf32, #tpu.memory_space<vmem>>, vector<2x128xf32>,
    return
  }
  func.func @transform_0(%arg0: i32) -> (i32, i32) {
    %c0_i32 = arith.constant 0 : i32
    %c0_i32_0 = arith.constant 0 : i32
    %c0_i32_1 = arith.constant 0 : i32
    return %c0_i32, %c0_i32_0 : i32, i32
  }
  func.func @transform_1(%arg0: i32) -> (i32, i32) {
    %c0_i32 = arith.constant 0 : i32
    %c0_i32_0 = arith.constant 0 : i32
    return %c0_i32, %arg0 : i32, i32
  }
  func.func @transform_2(%arg0: i32) -> (i32, i32) {
    %c0_i32 = arith.constant 0 : i32
    %c0_i32_0 = arith.constant 0 : i32
    return %c0_i32, %arg0 : i32, i32
  }
}

</mosaic_0001>

<llo_original>
// kernel: mlp_forward.1
$region0: #{mlp_forward.1}
  #allocation0 [shape = 'u32[]', space=smem, size = 0x4, offset = 0x4, fixed_abs, tag = 'smem constant byte address 0x4 - core index']
  #allocation1 [shape = 'u32[144,128]{1,0:T(1,128)}', space=vmem, size = 0x12000, scoped, tag = 'internal scratch']
  %s0 = inlined_call_operand.vmem [shape: f32[320,64], index: 0, kind: input, shape index: {}]
  %s1 = inlined_call_operand.vmem [shape: f32[1,128], index: 1, kind: input, shape index: {}]
  %s2 = inlined_call_operand.vmem [shape: f32[2,128], index: 2, kind: output, shape index: {}]
  %s3 = sld [smem:[#allocation0]]
  $region18: #{mlp_forward.1} parent=0
    _
  %s5 = ssub.s32 1, %s3
  %s6 = scalar_select 0, %s5, %s3
  // Predicated region
  $region2: #{mlp_forward.1} parent=0 // pred_check
    _
  $region3: #{mlp_forward.1} parent=0 // pred_check_branch
    %8 = sbr.rel (0) target = $region5
  $region4: #{mlp_forward.1} parent=0 // pred_region
    _
  $region5: #{mlp_forward.1} parent=0 // pred_fallthru
    _
  // Predicated region
  $region6: #{mlp_forward.1} parent=0 // pred_check
    _
  $region7: #{mlp_forward.1} parent=0 // pred_check_branch
    %10 = sbr.rel (0) target = $region9
  $region8: #{mlp_forward.1} parent=0 // pred_region
    _
  $region9: #{mlp_forward.1} parent=0 // pred_fallthru
    _
  %v11 = vld [vmem:[%s1] sm:$0x1]
  %v12 = vld [vmem:[%s0] sm:$0xff]
  %v13 = vld [vmem:[%s0 + $0x8] sm:$0x3]
  %15 = vset.pattern.permute.xlu0 0
  %16 = vperm.xlu0 %15, %v12
  %v17 = vpop.permute.xlu0 %16
  %20 = vset.pattern.permute.xlu0 0
  %21 = vperm.xlu0 %20, %v13
  %v22 = vpop.permute.xlu0 %21
  %v25 = vlaneseq
  %v26 = vshrl.u32 %v25, 7
  %v27 = vsub.s32 0, %v26
  %v28 = vrot.slane %v11, %v27
  %v30 = vmul.f32 %v17, %v28
  %v31 = vmul.f32 %v22, %v28
  %32 = vset.pattern.permute.xlu0 63
  %33 = vperm.xlu0 %32, %v12
  %v34 = vpop.permute.xlu0 %33
  %36 = vset.pattern.permute.xlu0 63
  %37 = vperm.xlu0 %36, %v13
  %v38 = vpop.permute.xlu0 %37
  %v40 = vadd.f32 %v30, %v34
  %v41 = vadd.f32 %v31, %v38
  %v42 = vmax.f32 %v40, 0.0
  %v43 = vmax.f32 %v41, 0.0
  %v44 = vld [vmem:[%s0 + $0x40] sm:$0xff]
  %v45 = vld [vmem:[%s0 + $0x48] sm:$0xff]
  %v46 = vld [vmem:[%s0 + $0x50] sm:$0xff]
  %v47 = vld [vmem:[%s0 + $0x58] sm:$0xff]
  %v48 = vld [vmem:[%s0 + $0x60] sm:$0xff]
  %v49 = vld [vmem:[%s0 + $0x68] sm:$0xff]
  %v50 = vld [vmem:[%s0 + $0x70] sm:$0x3]
  %52 = vset.pattern.permute.xlu0 63
  %53 = vperm.xlu0 %52, %v44
  %v54 = vpop.permute.xlu0 %53
  %57 = vset.pattern.permute.xlu0 63
  %58 = vperm.xlu0 %57, %v45
  %v59 = vpop.permute.xlu0 %58
  %62 = vset.pattern.permute.xlu0 63
  %63 = vperm.xlu0 %62, %v46
  %v64 = vpop.permute.xlu0 %63
  %67 = vset.pattern.permute.xlu0 63
  %68 = vperm.xlu0 %67, %v47
  %v69 = vpop.permute.xlu0 %68
  %72 = vset.pattern.permute.xlu0 63
  %73 = vperm.xlu0 %72, %v48
  %v74 = vpop.permute.xlu0 %73
  %77 = vset.pattern.permute.xlu0 63
  %78 = vperm.xlu0 %77, %v49
  %v79 = vpop.permute.xlu0 %78
  %82 = vset.pattern.permute.xlu0 63
  %83 = vperm.xlu0 %82, %v50
  %v84 = vpop.permute.xlu0 %83
  %vm86 = vcmask 80896
  %v87 = vsel %vm86, %v44, 0
  %v89 = vsel %vm86, %v45, 0
  %v91 = vsel %vm86, %v46, 0
  %v93 = vsel %vm86, %v47, 0
  %v95 = vsel %vm86, %v48, 0
  %v97 = vsel %vm86, %v49, 0
  %v99 = vsel %vm86, %v50, 0
  %vm101 = vcmask 1041408
  %v103 = vsel %vm101, %v43, 0
  %105 = vmatprep.subr.mxu0 0.0
  %106 = vmatpush1.msra.mxu0 %v42
  %107 = vmatprep.subr.mxu0 0.0
  %108 = vmatpush1.msra.mxu0 %v103
  %109 = vmatprep.subr.mxu0 0.0
  %110 = vmatpush1.msra.mxu0 0.0
  %111 = vmatprep.subr.mxu0 0.0
  %112 = vmatpush1.msra.mxu0 0.0
  %113 = vmatprep.subr.mxu0 0.0
  %114 = vmatpush1.msra.mxu0 0.0
  %115 = vmatprep.subr.mxu0 0.0
  %116 = vmatpush1.msra.mxu0 0.0
  %117 = vmatprep.subr.mxu0 0.0
  %118 = vmatpush1.msra.mxu0 0.0
  %119 = vmatprep.subr.mxu0 0.0
  %120 = vmatpush1.msra.mxu0 0.0
  %121 = vmatprep.subr.mxu0 0.0
  %122 = vmatpush1.msra.mxu0 0.0
  %123 = vmatprep.subr.mxu0 0.0
  %124 = vmatpush1.msra.mxu0 0.0
  %125 = vmatprep.subr.mxu0 0.0
  %126 = vmatpush1.msra.mxu0 0.0
  %127 = vmatprep.subr.mxu0 0.0
  %128 = vmatpush1.msra.mxu0 0.0
  %129 = vmatprep.subr.mxu0 0.0
  %130 = vmatpush1.msra.mxu0 0.0
  %131 = vmatprep.subr.mxu0 0.0
  %132 = vmatpush1.msra.mxu0 0.0
  %133 = vmatprep.subr.mxu0 0.0
  %134 = vmatpush1.msra.mxu0 0.0
  %135 = vmatprep.subr.mxu0 0.0
  %136 = vmatpush1.msra.mxu0 0.0
  %137 = vmatprep.subr.mxu0 0.0
  %138 = vmatpush1.msra.mxu0 0.0
  %139 = vmatprep.subr.mxu0 0.0
  %140 = vmatpush1.msra.mxu0 0.0
  %141 = vmatprep.subr.mxu0 0.0
  %142 = vmatpush1.msra.mxu0 0.0
  %143 = vmatprep.subr.mxu0 0.0
  %144 = vmatpush1.msra.mxu0 0.0
  %145 = vmatprep.subr.mxu0 0.0
  %146 = vmatpush1.msra.mxu0 0.0
  %147 = vmatprep.subr.mxu0 0.0
  %148 = vmatpush1.msra.mxu0 0.0
  %149 = vmatprep.subr.mxu0 0.0
  %150 = vmatpush1.msra.mxu0 0.0
  %151 = vmatprep.subr.mxu0 0.0
  %152 = vmatpush1.msra.mxu0 0.0
  %153 = vmatprep.subr.mxu0 0.0
  %154 = vmatpush1.msra.mxu0 0.0
  %155 = vmatprep.subr.mxu0 0.0
  %156 = vmatpush1.msra.mxu0 0.0
  %157 = vmatprep.subr.mxu0 0.0
  %158 = vmatpush1.msra.mxu0 0.0
  %159 = vmatprep.subr.mxu0 0.0
  %160 = vmatpush1.msra.mxu0 0.0
  %161 = vmatprep.subr.mxu0 0.0
  %162 = vmatpush1.msra.mxu0 0.0
  %163 = vmatprep.subr.mxu0 0.0
  %164 = vmatpush1.msra.mxu0 0.0
  %165 = vmatprep.subr.mxu0 0.0
  %166 = vmatpush1.msra.mxu0 0.0
  %167 = vmatprep.subr.mxu0 0.0
  %168 = vmatpush1.msra.mxu0 0.0
  %169 = vmatprep.mubr.f32.mxu0 0.0
  %170 = vmatmul.mubr.f32.gmra.mrb[0].mxu0 %v87
  %v171 = vpop.f32.mrb[0].mxu0
  %v172 = vadd.f32 %v54, %v171
  %v173 = vpop.f32.mrb[0].mxu0
  %174 = vmatprep.mubr.f32.mxu0 0.0
  %175 = vmatmul.mubr.f32.gmra.mrb[0].mxu0 %v89
  %v176 = vpop.f32.mrb[0].mxu0
  %v177 = vadd.f32 %v59, %v176
  %v178 = vpop.f32.mrb[0].mxu0
  %179 = vmatprep.mubr.f32.mxu0 0.0
  %180 = vmatmul.mubr.f32.gmra.mrb[0].mxu0 %v91
  %v181 = vpop.f32.mrb[0].mxu0
  %v182 = vadd.f32 %v64, %v181
  %v183 = vpop.f32.mrb[0].mxu0
  %184 = vmatprep.mubr.f32.mxu0 0.0
  %185 = vmatmul.mubr.f32.gmra.mrb[0].mxu0 %v93
  %v186 = vpop.f32.mrb[0].mxu0
  %v187 = vadd.f32 %v69, %v186
  %v188 = vpop.f32.mrb[0].mxu0
  %189 = vmatprep.mubr.f32.mxu0 0.0
  %190 = vmatmul.mubr.f32.gmra.mrb[0].mxu0 %v95
  %v191 = vpop.f32.mrb[0].mxu0
  %v192 = vadd.f32 %v74, %v191
  %v193 = vpop.f32.mrb[0].mxu0
  %194 = vmatprep.mubr.f32.mxu0 0.0
  %195 = vmatmul.mubr.f32.gmra.mrb[0].mxu0 %v97
  %v196 = vpop.f32.mrb[0].mxu0
  %v197 = vadd.f32 %v79, %v196
  %v198 = vpop.f32.mrb[0].mxu0
  %199 = vmatprep.mubr.f32.mxu0 0.0
  %200 = vmatmul.mubr.f32.gmra.mrb[0].mxu0 %v99
  %v201 = vpop.f32.mrb[0].mxu0
  %v202 = vadd.f32 %v84, %v201
  %v203 = vpop.f32.mrb[0].mxu0
  %204 = vdwg.mxu0
  %v205 = vmax.f32 %v172, 0.0
  %v206 = vmax.f32 %v177, 0.0
  %v207 = vmax.f32 %v182, 0.0
  %v208 = vmax.f32 %v187, 0.0
  %v209 = vmax.f32 %v192, 0.0
  %v210 = vmax.f32 %v197, 0.0
  %v211 = vmax.f32 %v202, 0.0
  %v212 = vld [vmem:[%s0 + $0x80] sm:$0xff]
  %v213 = vld [vmem:[%s0 + $0x88] sm:$0xff]
  %v214 = vld [vmem:[%s0 + $0x90] sm:$0xff]
  %v215 = vld [vmem:[%s0 + $0x98] sm:$0x3f]
  %217 = vset.pattern.permute.xlu0 63
  %218 = vperm.xlu0 %217, %v212
  %v219 = vpop.permute.xlu0 %218
  %222 = vset.pattern.permute.xlu0 63
  %223 = vperm.xlu0 %222, %v213
  %v224 = vpop.permute.xlu0 %223
  %227 = vset.pattern.permute.xlu0 63
  %228 = vperm.xlu0 %227, %v214
  %v229 = vpop.permute.xlu0 %228
  %232 = vset.pattern.permute.xlu0 63
  %233 = vperm.xlu0 %232, %v215
  %v234 = vpop.permute.xlu0 %233
  %vm236 = vcmask 408576
  %v237 = vsel %vm236, %v212, 0
  %v239 = vsel %vm236, %v213, 0
  %v241 = vsel %vm236, %v214, 0
  %v243 = vsel %vm236, %v215, 0
  %v246 = vsel %vm101, %v211, 0
  %248 = vmatprep.subr.mxu0 0.0
  %249 = vmatpush1.msra.mxu0 %v205
  %250 = vmatprep.subr.mxu0 0.0
  %251 = vmatpush1.msra.mxu0 %v206
  %252 = vmatprep.subr.mxu0 0.0
  %253 = vmatpush1.msra.mxu0 %v207
  %254 = vmatprep.subr.mxu0 0.0
  %255 = vmatpush1.msra.mxu0 %v208
  %256 = vmatprep.subr.mxu0 0.0
  %257 = vmatpush1.msra.mxu0 %v209
  %258 = vmatprep.subr.mxu0 0.0
  %259 = vmatpush1.msra.mxu0 %v210
  %260 = vmatprep.subr.mxu0 0.0
  %261 = vmatpush1.msra.mxu0 %v246
  %262 = vmatprep.subr.mxu0 0.0
  %263 = vmatpush1.msra.mxu0 0.0
  %264 = vmatprep.subr.mxu0 0.0
  %265 = vmatpush1.msra.mxu0 0.0
  %266 = vmatprep.subr.mxu0 0.0
  %267 = vmatpush1.msra.mxu0 0.0
  %268 = vmatprep.subr.mxu0 0.0
  %269 = vmatpush1.msra.mxu0 0.0
  %270 = vmatprep.subr.mxu0 0.0
  %271 = vmatpush1.msra.mxu0 0.0
  %272 = vmatprep.subr.mxu0 0.0
  %273 = vmatpush1.msra.mxu0 0.0
  %274 = vmatprep.subr.mxu0 0.0
  %275 = vmatpush1.msra.mxu0 0.0
  %276 = vmatprep.subr.mxu0 0.0
  %277 = vmatpush1.msra.mxu0 0.0
  %278 = vmatprep.subr.mxu0 0.0
  %279 = vmatpush1.msra.mxu0 0.0
  %280 = vmatprep.subr.mxu0 0.0
  %281 = vmatpush1.msra.mxu0 0.0
  %282 = vmatprep.subr.mxu0 0.0
  %283 = vmatpush1.msra.mxu0 0.0
  %284 = vmatprep.subr.mxu0 0.0
  %285 = vmatpush1.msra.mxu0 0.0
  %286 = vmatprep.subr.mxu0 0.0
  %287 = vmatpush1.msra.mxu0 0.0
  %288 = vmatprep.subr.mxu0 0.0
  %289 = vmatpush1.msra.mxu0 0.0
  %290 = vmatprep.subr.mxu0 0.0
  %291 = vmatpush1.msra.mxu0 0.0
  %292 = vmatprep.subr.mxu0 0.0
  %293 = vmatpush1.msra.mxu0 0.0
  %294 = vmatprep.subr.mxu0 0.0
  %295 = vmatpush1.msra.mxu0 0.0
  %296 = vmatprep.subr.mxu0 0.0
  %297 = vmatpush1.msra.mxu0 0.0
  %298 = vmatprep.subr.mxu0 0.0
  %299 = vmatpush1.msra.mxu0 0.0
  %300 = vmatprep.subr.mxu0 0.0
  %301 = vmatpush1.msra.mxu0 0.0
  %302 = vmatprep.subr.mxu0 0.0
  %303 = vmatpush1.msra.mxu0 0.0
  %304 = vmatprep.subr.mxu0 0.0
  %305 = vmatpush1.msra.mxu0 0.0
  %306 = vmatprep.subr.mxu0 0.0
  %307 = vmatpush1.msra.mxu0 0.0
  %308 = vmatprep.subr.mxu0 0.0
  %309 = vmatpush1.msra.mxu0 0.0
  %310 = vmatprep.subr.mxu0 0.0
  %311 = vmatpush1.msra.mxu0 0.0
  %312 = vmatprep.mubr.f32.mxu0 0.0
  %313 = vmatmul.mubr.f32.gmra.mrb[0].mxu0 %v237
  %v314 = vpop.f32.mrb[0].mxu0
  %v315 = vadd.f32 %v219, %v314
  %v316 = vpop.f32.mrb[0].mxu0
  %317 = vmatprep.mubr.f32.mxu0 0.0
  %318 = vmatmul.mubr.f32.gmra.mrb[0].mxu0 %v239
  %v319 = vpop.f32.mrb[0].mxu0
  %v320 = vadd.f32 %v224, %v319
  %v321 = vpop.f32.mrb[0].mxu0
  %322 = vmatprep.mubr.f32.mxu0 0.0
  %323 = vmatmul.mubr.f32.gmra.mrb[0].mxu0 %v241
  %v324 = vpop.f32.mrb[0].mxu0
  %v325 = vadd.f32 %v229, %v324
  %v326 = vpop.f32.mrb[0].mxu0
  %327 = vmatprep.mubr.f32.mxu0 0.0
  %328 = vmatmul.mubr.f32.gmra.mrb[0].mxu0 %v243
  %v329 = vpop.f32.mrb[0].mxu0
  %v330 = vadd.f32 %v234, %v329
  %v331 = vpop.f32.mrb[0].mxu0
  %332 = vdwg.mxu0
  %v333 = vmax.f32 %v315, 0.0
  %v334 = vmax.f32 %v320, 0.0
  %v335 = vmax.f32 %v325, 0.0
  %v336 = vmax.f32 %v330, 0.0
  %v337 = vld [vmem:[%s0 + $0xc0] sm:$0xff]
  %v338 = vld [vmem:[%s0 + $0xc8] sm:$0x3]
  %340 = vset.pattern.permute.xlu0 63
  %341 = vperm.xlu0 %340, %v337
  %v342 = vpop.permute.xlu0 %341
  %345 = vset.pattern.permute.xlu0 63
  %346 = vperm.xlu0 %345, %v338
  %v347 = vpop.permute.xlu0 %346
  %vm349 = vcmask 244736
  %v350 = vsel %vm349, %v337, 0
  %v352 = vsel %vm349, %v338, 0
  %vm354 = vcmask 1045504
  %v356 = vsel %vm354, %v336, 0
  %358 = vmatprep.subr.mxu0 0.0
  %359 = vmatpush1.msra.mxu0 %v333
  %360 = vmatprep.subr.mxu0 0.0
  %361 = vmatpush1.msra.mxu0 %v334
  %362 = vmatprep.subr.mxu0 0.0
  %363 = vmatpush1.msra.mxu0 %v335
  %364 = vmatprep.subr.mxu0 0.0
  %365 = vmatpush1.msra.mxu0 %v356
  %366 = vmatprep.subr.mxu0 0.0
  %367 = vmatpush1.msra.mxu0 0.0
  %368 = vmatprep.subr.mxu0 0.0
  %369 = vmatpush1.msra.mxu0 0.0
  %370 = vmatprep.subr.mxu0 0.0
  %371 = vmatpush1.msra.mxu0 0.0
  %372 = vmatprep.subr.mxu0 0.0
  %373 = vmatpush1.msra.mxu0 0.0
  %374 = vmatprep.subr.mxu0 0.0
  %375 = vmatpush1.msra.mxu0 0.0
  %376 = vmatprep.subr.mxu0 0.0
  %377 = vmatpush1.msra.mxu0 0.0
  %378 = vmatprep.subr.mxu0 0.0
  %379 = vmatpush1.msra.mxu0 0.0
  %380 = vmatprep.subr.mxu0 0.0
  %381 = vmatpush1.msra.mxu0 0.0
  %382 = vmatprep.subr.mxu0 0.0
  %383 = vmatpush1.msra.mxu0 0.0
  %384 = vmatprep.subr.mxu0 0.0
  %385 = vmatpush1.msra.mxu0 0.0
  %386 = vmatprep.subr.mxu0 0.0
  %387 = vmatpush1.msra.mxu0 0.0
  %388 = vmatprep.subr.mxu0 0.0
  %389 = vmatpush1.msra.mxu0 0.0
  %390 = vmatprep.subr.mxu0 0.0
  %391 = vmatpush1.msra.mxu0 0.0
  %392 = vmatprep.subr.mxu0 0.0
  %393 = vmatpush1.msra.mxu0 0.0
  %394 = vmatprep.subr.mxu0 0.0
  %395 = vmatpush1.msra.mxu0 0.0
  %396 = vmatprep.subr.mxu0 0.0
  %397 = vmatpush1.msra.mxu0 0.0
  %398 = vmatprep.subr.mxu0 0.0
  %399 = vmatpush1.msra.mxu0 0.0
  %400 = vmatprep.subr.mxu0 0.0
  %401 = vmatpush1.msra.mxu0 0.0
  %402 = vmatprep.subr.mxu0 0.0
  %403 = vmatpush1.msra.mxu0 0.0
  %404 = vmatprep.subr.mxu0 0.0
  %405 = vmatpush1.msra.mxu0 0.0
  %406 = vmatprep.subr.mxu0 0.0
  %407 = vmatpush1.msra.mxu0 0.0
  %408 = vmatprep.subr.mxu0 0.0
  %409 = vmatpush1.msra.mxu0 0.0
  %410 = vmatprep.subr.mxu0 0.0
  %411 = vmatpush1.msra.mxu0 0.0
  %412 = vmatprep.subr.mxu0 0.0
  %413 = vmatpush1.msra.mxu0 0.0
  %414 = vmatprep.subr.mxu0 0.0
  %415 = vmatpush1.msra.mxu0 0.0
  %416 = vmatprep.subr.mxu0 0.0
  %417 = vmatpush1.msra.mxu0 0.0
  %418 = vmatprep.subr.mxu0 0.0
  %419 = vmatpush1.msra.mxu0 0.0
  %420 = vmatprep.subr.mxu0 0.0
  %421 = vmatpush1.msra.mxu0 0.0
  %422 = vmatprep.mubr.f32.mxu0 0.0
  %423 = vmatmul.mubr.f32.gmra.mrb[0].mxu0 %v350
  %v424 = vpop.f32.mrb[0].mxu0
  %v425 = vadd.f32 %v342, %v424
  %v426 = vpop.f32.mrb[0].mxu0
  %427 = vmatprep.mubr.f32.mxu0 0.0
  %428 = vmatmul.mubr.f32.gmra.mrb[0].mxu0 %v352
  %v429 = vpop.f32.mrb[0].mxu0
  %v430 = vadd.f32 %v347, %v429
  %v431 = vpop.f32.mrb[0].mxu0
  %432 = vdwg.mxu0
  %v433 = vmax.f32 %v425, 0.0
  %v434 = vmax.f32 %v430, 0.0
  %v435 = vld [vmem:[%s0 + $0x100] sm:$0x3]
  %437 = vset.pattern.permute.xlu0 63
  %438 = vperm.xlu0 %437, %v435
  %v439 = vpop.permute.xlu0 %438
  %v441 = vsel %vm86, %v435, 0
  %v444 = vsel %vm101, %v434, 0
  %446 = vmatprep.subr.mxu0 0.0
  %447 = vmatpush1.msra.mxu0 %v433
  %448 = vmatprep.subr.mxu0 0.0
  %449 = vmatpush1.msra.mxu0 %v444
  %450 = vmatprep.subr.mxu0 0.0
  %451 = vmatpush1.msra.mxu0 0.0
  %452 = vmatprep.subr.mxu0 0.0
  %453 = vmatpush1.msra.mxu0 0.0
  %454 = vmatprep.subr.mxu0 0.0
  %455 = vmatpush1.msra.mxu0 0.0
  %456 = vmatprep.subr.mxu0 0.0
  %457 = vmatpush1.msra.mxu0 0.0
  %458 = vmatprep.subr.mxu0 0.0
  %459 = vmatpush1.msra.mxu0 0.0
  %460 = vmatprep.subr.mxu0 0.0
  %461 = vmatpush1.msra.mxu0 0.0
  %462 = vmatprep.subr.mxu0 0.0
  %463 = vmatpush1.msra.mxu0 0.0
  %464 = vmatprep.subr.mxu0 0.0
  %465 = vmatpush1.msra.mxu0 0.0
  %466 = vmatprep.subr.mxu0 0.0
  %467 = vmatpush1.msra.mxu0 0.0
  %468 = vmatprep.subr.mxu0 0.0
  %469 = vmatpush1.msra.mxu0 0.0
  %470 = vmatprep.subr.mxu0 0.0
  %471 = vmatpush1.msra.mxu0 0.0
  %472 = vmatprep.subr.mxu0 0.0
  %473 = vmatpush1.msra.mxu0 0.0
  %474 = vmatprep.subr.mxu0 0.0
  %475 = vmatpush1.msra.mxu0 0.0
  %476 = vmatprep.subr.mxu0 0.0
  %477 = vmatpush1.msra.mxu0 0.0
  %478 = vmatprep.subr.mxu0 0.0
  %479 = vmatpush1.msra.mxu0 0.0
  %480 = vmatprep.subr.mxu0 0.0
  %481 = vmatpush1.msra.mxu0 0.0
  %482 = vmatprep.subr.mxu0 0.0
  %483 = vmatpush1.msra.mxu0 0.0
  %484 = vmatprep.subr.mxu0 0.0
  %485 = vmatpush1.msra.mxu0 0.0
  %486 = vmatprep.subr.mxu0 0.0
  %487 = vmatpush1.msra.mxu0 0.0
  %488 = vmatprep.subr.mxu0 0.0
  %489 = vmatpush1.msra.mxu0 0.0
  %490 = vmatprep.subr.mxu0 0.0
  %491 = vmatpush1.msra.mxu0 0.0
  %492 = vmatprep.subr.mxu0 0.0
  %493 = vmatpush1.msra.mxu0 0.0
  %494 = vmatprep.subr.mxu0 0.0
  %495 = vmatpush1.msra.mxu0 0.0
  %496 = vmatprep.subr.mxu0 0.0
  %497 = vmatpush1.msra.mxu0 0.0
  %498 = vmatprep.subr.mxu0 0.0
  %499 = vmatpush1.msra.mxu0 0.0
  %500 = vmatprep.subr.mxu0 0.0
  %501 = vmatpush1.msra.mxu0 0.0
  %502 = vmatprep.subr.mxu0 0.0
  %503 = vmatpush1.msra.mxu0 0.0
  %504 = vmatprep.subr.mxu0 0.0
  %505 = vmatpush1.msra.mxu0 0.0
  %506 = vmatprep.subr.mxu0 0.0
  %507 = vmatpush1.msra.mxu0 0.0
  %508 = vmatprep.subr.mxu0 0.0
  %509 = vmatpush1.msra.mxu0 0.0
  %510 = vmatprep.mubr.f32.mxu0 0.0
  %511 = vmatmul.mubr.f32.gmra.mrb[0].mxu0 %v441
  %v512 = vpop.f32.mrb[0].mxu0
  %v513 = vadd.f32 %v439, %v512
  %v514 = vpop.f32.mrb[0].mxu0
  %515 = vdwg.mxu0
  %516 = vst [vmem:[%s2] sm:$0x3] %v513
  // Predicated region
  $region10: #{mlp_forward.1} parent=0 // pred_check
    _
  $region11: #{mlp_forward.1} parent=0 // pred_check_branch
    %518 = sbr.rel (0) target = $region13
  $region12: #{mlp_forward.1} parent=0 // pred_region
    _
  $region13: #{mlp_forward.1} parent=0 // pred_fallthru
    _
  // Predicated region
  $region14: #{mlp_forward.1} parent=0 // pred_check
    _
  $region15: #{mlp_forward.1} parent=0 // pred_check_branch
    %520 = sbr.rel (0) target = $region17
  $region16: #{mlp_forward.1} parent=0 // pred_region
    _
  $region17: #{mlp_forward.1} parent=0 // pred_fallthru
    _

</llo_original>
